<compile_context>
chip_gen: v7x
topology: tpu7x:2x2x1
jax: 0.10.0
libtpu: 0.0.40
codegen_flags: <defaults>
</compile_context>

<pallas_src>
import math

import jax
import jax.numpy as jnp
from jax.experimental import pallas as pl
from jax.experimental.pallas import tpu as pltpu


_VMEM_BUDGET_BYTES = 24 * 1024 * 1024   # headroom under v7x's 32 MiB scoped-VMEM default
_VMEM_LIMIT_BYTES = 32 * 1024 * 1024


def _round_up(v, m):
    return ((v + m - 1) // m) * m


def _vmem_block_bytes(c_in, c_out, tn, act_itemsize, weights):
    """Padded, double-buffered VMEM footprint estimate for one grid step."""
    lane_n = _round_up(tn, 128)
    total = 2 * _round_up(c_in, 8) * lane_n * act_itemsize       # input block, 2 buffers
    total += 2 * _round_up(c_out, 8) * lane_n * act_itemsize     # output block, 2 buffers
    for w in weights:
        co, ci = w.shape
        total += 2 * _round_up(co, 8) * _round_up(ci, 128) * jnp.dtype(w.dtype).itemsize
    return total


def _make_fused_kernel(num_layers, block_n, sub_n):
    """Kernel chaining `num_layers` (W @ h -> ReLU) stages, lane-dense, sub-slab unrolled."""
    num_sub = block_n // sub_n
    assert num_sub * sub_n == block_n

    def kernel(x_ref, *rest):
        w_refs = rest[:num_layers]
        o_ref = rest[num_layers]
        ws = [w_ref[...] for w_ref in w_refs]          # tiny weights, loaded once per step
        # Static sub-slab loop (equivalent to lax.fori_loop(..., unroll=True)): keeps each
        # sub-slab's layer chain vreg-resident instead of spilling a (C, block_n) intermediate.
        for j in range(num_sub):
            lo = j * sub_n
            h = x_ref[:, lo:lo + sub_n]                # (C_in, sub_n) -- lanes fully dense
            for w in ws:
                y = jnp.dot(w, h.astype(w.dtype),      # (C_out_l, sub_n), f32 MXU accumulate
                            preferred_element_type=jnp.float32)
                h = jnp.maximum(y, 0.0)                # ReLU in f32 vregs (v5e-safe)
            o_ref[:, lo:lo + sub_n] = h.astype(o_ref.dtype)

    return kernel


def pointwise_reducer_forward(x_cn, weights, *, tile_n=4096, sub_n=512,
                              core_parallel=False):
    """Fused forward for the whole layer chain, channels-first (lane-dense) layout.

    x_cn:    (C_in, N)   activations, batch N on the lane axis
    weights: list of (C_out_l, C_in_l) arrays (PyTorch Conv1d weight with kernel dim squeezed)
    returns: (C_out, N)

    Note: the last grid block along N may be partial; padded (OOB) batch columns feed only
    discarded output columns, which is valid because every column is independent here.
    """
    c_in, n = x_cn.shape
    assert weights, "need at least one layer"
    assert weights[0].shape[1] == c_in, (weights[0].shape, c_in)
    for a, b in zip(weights[:-1], weights[1:]):
        assert b.shape[1] == a.shape[0], f"layer chain mismatch: {a.shape} -> {b.shape}"
    c_out = weights[-1].shape[0]
    num_layers = len(weights)
    itemsize = jnp.dtype(x_cn.dtype).itemsize

    # Tile over the lane (batch) axis.  A single full-width block is always legal; a tiled
    # block must be a multiple of 128 lanes.  Shrink until the double-buffered footprint
    # fits the VMEM budget (sized against v7x).
    if n <= tile_n:
        tn = n
    else:
        tn = max(128, (int(tile_n) // 128) * 128)
        while tn > 128 and _vmem_block_bytes(c_in, c_out, tn, itemsize, weights) > _VMEM_BUDGET_BYTES:
            tn = max(128, (tn // 2 // 128) * 128)
    grid = (pl.cdiv(n, tn),)

    # Sub-slab width for the in-kernel unrolled loop (bounds vreg live ranges).
    sub = sub_n if (tn > sub_n and tn % sub_n == 0) else tn

    in_specs = [pl.BlockSpec((c_in, tn), lambda i: (0, i))]
    for w in weights:
        co, ci = w.shape
        # Same block index every grid step -> each (tiny) weight is fetched once and stays
        # resident in VMEM for the whole grid.
        in_specs.append(pl.BlockSpec((co, ci), lambda i: (0, 0)))
    out_specs = pl.BlockSpec((c_out, tn), lambda i: (0, i))

    flops = 2 * n * sum(int(w.shape[0]) * int(w.shape[1]) for w in weights)
    bytes_accessed = (
        n * c_in * itemsize
        + sum(int(w.size) * jnp.dtype(w.dtype).itemsize for w in weights)
        + n * c_out * itemsize
    )

    # "parallel" is sufficient on v5e/v6e (1 TC); on v7x pass core_parallel=True so the
    # batch grid axis is actually sharded across both TensorCores.
    batch_sem = pltpu.CORE_PARALLEL if core_parallel else pltpu.PARALLEL

    return pl.pallas_call(
        _make_fused_kernel(num_layers, tn, sub),
        out_shape=jax.ShapeDtypeStruct((c_out, n), x_cn.dtype),
        grid_spec=pl.GridSpec(grid=grid, in_specs=in_specs, out_specs=out_specs),
        compiler_params=pltpu.CompilerParams(
            dimension_semantics=(batch_sem,),
            vmem_limit_bytes=_VMEM_LIMIT_BYTES,
        ),
        cost_estimate=pl.CostEstimate(
            flops=flops, transcendentals=0, bytes_accessed=bytes_accessed
        ),
    )(x_cn, *weights)


class PointwiseReducer:
    """JAX/Pallas port of the PyTorch PointwiseReducer.

    planes: list of channel counts; builds len(planes)-1 layers of
    Conv1d(planes[i] -> planes[i+1], kernel=1, bias=False) + ReLU, all fused into a single
    lane-dense Pallas kernel at call time.
    """

    def __init__(self, planes, key, dtype=jnp.float32):
        self.planes = [int(round(p)) for p in planes]
        assert len(self.planes) >= 2, "need at least one layer"
        self.weights = []
        for i in range(len(self.planes) - 1):
            key, sub = jax.random.split(key)
            c_in, c_out = self.planes[i], self.planes[i + 1]
            # PyTorch Conv1d weight is (c_out, c_in, 1); store it squeezed as (c_out, c_in).
            bound = 1.0 / math.sqrt(float(c_in))  # kernel_size = 1 -> fan_in = c_in
            w = jax.random.uniform(sub, (c_out, c_in), dtype=dtype,
                                   minval=-bound, maxval=bound)
            self.weights.append(w)

    def __call__(self, x, **kw):
        # PyTorch-parity interface: x (N, C_in) -> (N, C_out).
        # The kernel is channels-first (lane-dense); the two boundary transposes are layout
        # plumbing -- if the surrounding model keeps activations channels-first, use
        # apply_cn() and skip them.
        return pointwise_reducer_forward(x.T, self.weights, **kw).T

    def apply_cn(self, x_cn, **kw):
        # Native lane-dense path: x_cn (C_in, N) -> (C_out, N), no boundary transposes.
        return pointwise_reducer_forward(x_cn, self.weights, **kw)


def _reference(x, weights):
    # Pure-JAX reference (PyTorch (N, C) layout) for correctness checking.
    h = x.astype(jnp.float32)
    for w in weights:
        h = jnp.maximum(h @ w.astype(jnp.float32).T, 0.0)
    return h.astype(x.dtype)


if __name__ == "__main__":
    key = jax.random.PRNGKey(0)
    key, xkey, xkey2 = jax.random.split(key, 3)

    planes = [32, 64, 16]  # C_in=32 -> 64 -> 16
    model = PointwiseReducer(planes, key)

    # Small batch: single full-width block path.
    batch = 8
    x = jax.random.normal(xkey, (batch, planes[0]), dtype=jnp.float32)
    out = jax.block_until_ready(model(x))
    ref = _reference(x, model.weights)
    assert out.shape == (batch, planes[-1]), out.shape
    assert jnp.allclose(out, ref, atol=1e-5, rtol=1e-5), "mismatch vs reference (small)"

    # Larger batch: exercises the tiled pipeline, the unrolled sub-slab loop, and a partial
    # last block on the lane axis.
    n_big = 2080  # > tile_n=1024, not a multiple of it
    x_big = jax.random.normal(xkey2, (n_big, planes[0]), dtype=jnp.float32)
    out_big = jax.block_until_ready(model(x_big, tile_n=1024, sub_n=512))
    ref_big = _reference(x_big, model.weights)
    assert out_big.shape == (n_big, planes[-1]), out_big.shape
    assert jnp.allclose(out_big, ref_big, atol=1e-5, rtol=1e-5), "mismatch vs reference (tiled)"

    # Channels-first native path (no boundary transposes).
    out_cn = jax.block_until_ready(model.apply_cn(x_big.T, tile_n=1024))
    assert out_cn.shape == (planes[-1], n_big), out_cn.shape
    assert jnp.allclose(out_cn.T, ref_big, atol=1e-5, rtol=1e-5), "mismatch vs reference (cn)"

    print("KERNEL_OK")
</pallas_src>

<mosaic_0001>
module attributes {stable_mosaic.version = 11 : i64} {
  func.func @kernel(%arg0: i32, %arg1: memref<32x8xf32, #tpu.memory_space<vmem>>, %arg2: memref<64x32xf32, #tpu.memory_space<vmem>>, %arg3: memref<16x64xf32, #tpu.memory_space<vmem>>, %arg4: memref<16x8xf32, #tpu.memory_space<vmem>>) attributes {dimension_semantics = [#tpu.dimension_semantics<parallel>], iteration_bounds = array<i64: 1>, scalar_prefetch = 0 : i64, scratch_operands = 0 : i64, tpu.core_type = #tpu.core_type<tc>, window_params = [{transform_indices = @transform_0, window_bounds = array<i64: 32, 8>}, {pipeline_mode = #tpu.pipeline_mode<synchronous>, transform_indices = @transform_1, window_bounds = array<i64: 64, 32>}, {pipeline_mode = #tpu.pipeline_mode<synchronous>, transform_indices = @transform_2, window_bounds = array<i64: 16, 64>}, {transform_indices = @transform_3, window_bounds = array<i64: 16, 8>}]} {
    %c0 = arith.constant 0 : index
    %c0_0 = arith.constant 0 : index
    %0 = vector.load %arg2[%c0, %c0_0] : memref<64x32xf32, #tpu.memory_space<vmem>>, vector<64x32xf32>
    %c0_1 = arith.constant 0 : index
    %c0_2 = arith.constant 0 : index
    %1 = vector.load %arg3[%c0_1, %c0_2] : memref<16x64xf32, #tpu.memory_space<vmem>>, vector<16x64xf32>
    %c0_3 = arith.constant 0 : index
    %c0_4 = arith.constant 0 : index
    %2 = vector.load %arg1[%c0_3, %c0_4] : memref<32x8xf32, #tpu.memory_space<vmem>>, vector<32x8xf32>
    %cst = arith.constant dense<0.000000e+00> : vector<64x8xf32>
    %3 = tpu.matmul %0, %2, %cst {dimension_numbers = #tpu.dot_dimension_numbers<[1], [0], [0], [1], [0, 0, 1, 1], [], []>} : vector<64x32xf32>, vector<32x8xf32>, vector<64x8xf32> -> vector<64x8xf32>
    %cst_5 = arith.constant 0.000000e+00 : f32
    %4 = vector.broadcast %cst_5 : f32 to vector<64x8xf32>
    %5 = arith.maximumf %3, %4 : vector<64x8xf32>
    %cst_6 = arith.constant dense<0.000000e+00> : vector<16x8xf32>
    %6 = tpu.matmul %1, %5, %cst_6 {dimension_numbers = #tpu.dot_dimension_numbers<[1], [0], [0], [1], [0, 0, 1, 1], [], []>} : vector<16x64xf32>, vector<64x8xf32>, vector<16x8xf32> -> vector<16x8xf32>
    %cst_7 = arith.constant 0.000000e+00 : f32
    %7 = vector.broadcast %cst_7 : f32 to vector<16x8xf32>
    %8 = arith.maximumf %6, %7 : vector<16x8xf32>
    %c0_8 = arith.constant 0 : index
    %c0_9 = arith.constant 0 : index
    %9 = vector.load %arg4[%c0_8, %c0_9] : memref<16x8xf32, #tpu.memory_space<vmem>>, vector<16x8xf32>
    tpu.vector_store %arg4[%c0_8, %c0_9], %8 {strides = array<i32>} : memref<16x8xf32, #tpu.memory_space<vmem>>, vector<16x8xf32>,
    return
  }
  func.func @transform_0(%arg0: i32) -> (i32, i32) {
    %c0_i32 = arith.constant 0 : i32
    %c0_i32_0 = arith.constant 0 : i32
    return %c0_i32, %arg0 : i32, i32
  }
  func.func @transform_1(%arg0: i32) -> (i32, i32) {
    %c0_i32 = arith.constant 0 : i32
    %c0_i32_0 = arith.constant 0 : i32
    %c0_i32_1 = arith.constant 0 : i32
    return %c0_i32, %c0_i32_0 : i32, i32
  }
  func.func @transform_2(%arg0: i32) -> (i32, i32) {
    %c0_i32 = arith.constant 0 : i32
    %c0_i32_0 = arith.constant 0 : i32
    %c0_i32_1 = arith.constant 0 : i32
    return %c0_i32, %c0_i32_0 : i32, i32
  }
  func.func @transform_3(%arg0: i32) -> (i32, i32) {
    %c0_i32 = arith.constant 0 : i32
    %c0_i32_0 = arith.constant 0 : i32
    return %c0_i32, %arg0 : i32, i32
  }
}

</mosaic_0001>

<llo_original>
// kernel: tpu_custom_call.1
$region0: #{tpu_custom_call.1}
  #allocation0 [shape = 'u32[]', space=smem, size = 0x4, offset = 0x4, fixed_abs, tag = 'smem constant byte address 0x4 - core index']
  #allocation1 [shape = 'u32[144,128]{1,0:T(1,128)}', space=vmem, size = 0x12000, scoped, tag = 'internal scratch']
  %s0 = inlined_call_operand.vmem [shape: f32[32,8], index: 0, kind: input, shape index: {}]
  %s1 = inlined_call_operand.vmem [shape: f32[64,32], index: 1, kind: input, shape index: {}]
  %s2 = inlined_call_operand.vmem [shape: f32[16,64], index: 2, kind: input, shape index: {}]
  %s3 = inlined_call_operand.vmem [shape: f32[16,8], index: 3, kind: output, shape index: {}]
  %s4 = sld [smem:[#allocation0]]
  $region22: #{tpu_custom_call.1} parent=0
    _
  %s6 = ssub.s32 1, %s4
  %s7 = scalar_select 0, %s6, %s4
  // Predicated region
  $region2: #{tpu_custom_call.1} parent=0 // pred_check
    _
  $region3: #{tpu_custom_call.1} parent=0 // pred_check_branch
    %9 = sbr.rel (0) target = $region5
  $region4: #{tpu_custom_call.1} parent=0 // pred_region
    _
  $region5: #{tpu_custom_call.1} parent=0 // pred_fallthru
    _
  // Predicated region
  $region6: #{tpu_custom_call.1} parent=0 // pred_check
    _
  $region7: #{tpu_custom_call.1} parent=0 // pred_check_branch
    %11 = sbr.rel (0) target = $region9
  $region8: #{tpu_custom_call.1} parent=0 // pred_region
    _
  $region9: #{tpu_custom_call.1} parent=0 // pred_fallthru
    _
  // Predicated region
  $region10: #{tpu_custom_call.1} parent=0 // pred_check
    _
  $region11: #{tpu_custom_call.1} parent=0 // pred_check_branch
    %13 = sbr.rel (0) target = $region13
  $region12: #{tpu_custom_call.1} parent=0 // pred_region
    _
  $region13: #{tpu_custom_call.1} parent=0 // pred_fallthru
    _
  %v14 = vld [vmem:[%s1] sm:$0xff]
  %v15 = vld [vmem:[%s1 + $0x8] sm:$0xff]
  %v16 = vld [vmem:[%s1 + $0x10] sm:$0xff]
  %v17 = vld [vmem:[%s1 + $0x18] sm:$0xff]
  %v18 = vld [vmem:[%s1 + $0x20] sm:$0xff]
  %v19 = vld [vmem:[%s1 + $0x28] sm:$0xff]
  %v20 = vld [vmem:[%s1 + $0x30] sm:$0xff]
  %v21 = vld [vmem:[%s1 + $0x38] sm:$0xff]
  %v22 = vld [vmem:[%s2] sm:$0xff]
  %v23 = vld [vmem:[%s2 + $0x8] sm:$0xff]
  %v24 = vld [vmem:[%s0] sm:$0xff]
  %v25 = vld [vmem:[%s0 + $0x8] sm:$0xff]
  %v26 = vld [vmem:[%s0 + $0x10] sm:$0xff]
  %v27 = vld [vmem:[%s0 + $0x18] sm:$0xff]
  %vm28 = vcmask 261120
  %v30 = vsel %vm28, %v14, 0
  %v33 = vsel %vm28, %v15, 0
  %v36 = vsel %vm28, %v16, 0
  %v39 = vsel %vm28, %v17, 0
  %v42 = vsel %vm28, %v18, 0
  %v45 = vsel %vm28, %v19, 0
  %v48 = vsel %vm28, %v20, 0
  %v51 = vsel %vm28, %v21, 0
  %53 = vmatprep.subr.mxu0 0.0
  %54 = vmatpush1.msra.mxu0 %v24
  %55 = vmatprep.subr.mxu0 0.0
  %56 = vmatpush1.msra.mxu0 %v25
  %57 = vmatprep.subr.mxu0 0.0
  %58 = vmatpush1.msra.mxu0 %v26
  %59 = vmatprep.subr.mxu0 0.0
  %60 = vmatpush1.msra.mxu0 %v27
  %61 = vmatprep.subr.mxu0 0.0
  %62 = vmatpush1.msra.mxu0 0.0
  %63 = vmatprep.subr.mxu0 0.0
  %64 = vmatpush1.msra.mxu0 0.0
  %65 = vmatprep.subr.mxu0 0.0
  %66 = vmatpush1.msra.mxu0 0.0
  %67 = vmatprep.subr.mxu0 0.0
  %68 = vmatpush1.msra.mxu0 0.0
  %69 = vmatprep.subr.mxu0 0.0
  %70 = vmatpush1.msra.mxu0 0.0
  %71 = vmatprep.subr.mxu0 0.0
  %72 = vmatpush1.msra.mxu0 0.0
  %73 = vmatprep.subr.mxu0 0.0
  %74 = vmatpush1.msra.mxu0 0.0
  %75 = vmatprep.subr.mxu0 0.0
  %76 = vmatpush1.msra.mxu0 0.0
  %77 = vmatprep.subr.mxu0 0.0
  %78 = vmatpush1.msra.mxu0 0.0
  %79 = vmatprep.subr.mxu0 0.0
  %80 = vmatpush1.msra.mxu0 0.0
  %81 = vmatprep.subr.mxu0 0.0
  %82 = vmatpush1.msra.mxu0 0.0
  %83 = vmatprep.subr.mxu0 0.0
  %84 = vmatpush1.msra.mxu0 0.0
  %85 = vmatprep.subr.mxu0 0.0
  %86 = vmatpush1.msra.mxu0 0.0
  %87 = vmatprep.subr.mxu0 0.0
  %88 = vmatpush1.msra.mxu0 0.0
  %89 = vmatprep.subr.mxu0 0.0
  %90 = vmatpush1.msra.mxu0 0.0
  %91 = vmatprep.subr.mxu0 0.0
  %92 = vmatpush1.msra.mxu0 0.0
  %93 = vmatprep.subr.mxu0 0.0
  %94 = vmatpush1.msra.mxu0 0.0
  %95 = vmatprep.subr.mxu0 0.0
  %96 = vmatpush1.msra.mxu0 0.0
  %97 = vmatprep.subr.mxu0 0.0
  %98 = vmatpush1.msra.mxu0 0.0
  %99 = vmatprep.subr.mxu0 0.0
  %100 = vmatpush1.msra.mxu0 0.0
  %101 = vmatprep.subr.mxu0 0.0
  %102 = vmatpush1.msra.mxu0 0.0
  %103 = vmatprep.subr.mxu0 0.0
  %104 = vmatpush1.msra.mxu0 0.0
  %105 = vmatprep.subr.mxu0 0.0
  %106 = vmatpush1.msra.mxu0 0.0
  %107 = vmatprep.subr.mxu0 0.0
  %108 = vmatpush1.msra.mxu0 0.0
  %109 = vmatprep.subr.mxu0 0.0
  %110 = vmatpush1.msra.mxu0 0.0
  %111 = vmatprep.subr.mxu0 0.0
  %112 = vmatpush1.msra.mxu0 0.0
  %113 = vmatprep.subr.mxu0 0.0
  %114 = vmatpush1.msra.mxu0 0.0
  %115 = vmatprep.subr.mxu0 0.0
  %116 = vmatpush1.msra.mxu0 0.0
  %117 = vmatprep.mubr.f32.mxu0 0.0
  %118 = vmatmul.mubr.f32.gmra.mrb[0].mxu0 %v30
  %v119 = vpop.f32.mrb[0].mxu0
  %v120 = vadd.f32 0.0, %v119
  %v121 = vpop.f32.mrb[0].mxu0
  %122 = vmatprep.mubr.f32.mxu0 0.0
  %123 = vmatmul.mubr.f32.gmra.mrb[0].mxu0 %v33
  %v124 = vpop.f32.mrb[0].mxu0
  %v125 = vadd.f32 0.0, %v124
  %v126 = vpop.f32.mrb[0].mxu0
  %127 = vmatprep.mubr.f32.mxu0 0.0
  %128 = vmatmul.mubr.f32.gmra.mrb[0].mxu0 %v36
  %v129 = vpop.f32.mrb[0].mxu0
  %v130 = vadd.f32 0.0, %v129
  %v131 = vpop.f32.mrb[0].mxu0
  %132 = vmatprep.mubr.f32.mxu0 0.0
  %133 = vmatmul.mubr.f32.gmra.mrb[0].mxu0 %v39
  %v134 = vpop.f32.mrb[0].mxu0
  %v135 = vadd.f32 0.0, %v134
  %v136 = vpop.f32.mrb[0].mxu0
  %137 = vmatprep.mubr.f32.mxu0 0.0
  %138 = vmatmul.mubr.f32.gmra.mrb[0].mxu0 %v42
  %v139 = vpop.f32.mrb[0].mxu0
  %v140 = vadd.f32 0.0, %v139
  %v141 = vpop.f32.mrb[0].mxu0
  %142 = vmatprep.mubr.f32.mxu0 0.0
  %143 = vmatmul.mubr.f32.gmra.mrb[0].mxu0 %v45
  %v144 = vpop.f32.mrb[0].mxu0
  %v145 = vadd.f32 0.0, %v144
  %v146 = vpop.f32.mrb[0].mxu0
  %147 = vmatprep.mubr.f32.mxu0 0.0
  %148 = vmatmul.mubr.f32.gmra.mrb[0].mxu0 %v48
  %v149 = vpop.f32.mrb[0].mxu0
  %v150 = vadd.f32 0.0, %v149
  %v151 = vpop.f32.mrb[0].mxu0
  %152 = vmatprep.mubr.f32.mxu0 0.0
  %153 = vmatmul.mubr.f32.gmra.mrb[0].mxu0 %v51
  %v154 = vpop.f32.mrb[0].mxu0
  %v155 = vadd.f32 0.0, %v154
  %v156 = vpop.f32.mrb[0].mxu0
  %157 = vdwg.mxu0
  %v158 = vmax.f32 %v120, 0.0
  %v159 = vmax.f32 %v125, 0.0
  %v160 = vmax.f32 %v130, 0.0
  %v161 = vmax.f32 %v135, 0.0
  %v162 = vmax.f32 %v140, 0.0
  %v163 = vmax.f32 %v145, 0.0
  %v164 = vmax.f32 %v150, 0.0
  %v165 = vmax.f32 %v155, 0.0
  %vm166 = vcmask 523264
  %v168 = vsel %vm166, %v22, 0
  %v171 = vsel %vm166, %v23, 0
  %173 = vmatprep.subr.mxu0 0.0
  %174 = vmatpush1.msra.mxu0 %v158
  %175 = vmatprep.subr.mxu0 0.0
  %176 = vmatpush1.msra.mxu0 %v159
  %177 = vmatprep.subr.mxu0 0.0
  %178 = vmatpush1.msra.mxu0 %v160
  %179 = vmatprep.subr.mxu0 0.0
  %180 = vmatpush1.msra.mxu0 %v161
  %181 = vmatprep.subr.mxu0 0.0
  %182 = vmatpush1.msra.mxu0 %v162
  %183 = vmatprep.subr.mxu0 0.0
  %184 = vmatpush1.msra.mxu0 %v163
  %185 = vmatprep.subr.mxu0 0.0
  %186 = vmatpush1.msra.mxu0 %v164
  %187 = vmatprep.subr.mxu0 0.0
  %188 = vmatpush1.msra.mxu0 %v165
  %189 = vmatprep.subr.mxu0 0.0
  %190 = vmatpush1.msra.mxu0 0.0
  %191 = vmatprep.subr.mxu0 0.0
  %192 = vmatpush1.msra.mxu0 0.0
  %193 = vmatprep.subr.mxu0 0.0
  %194 = vmatpush1.msra.mxu0 0.0
  %195 = vmatprep.subr.mxu0 0.0
  %196 = vmatpush1.msra.mxu0 0.0
  %197 = vmatprep.subr.mxu0 0.0
  %198 = vmatpush1.msra.mxu0 0.0
  %199 = vmatprep.subr.mxu0 0.0
  %200 = vmatpush1.msra.mxu0 0.0
  %201 = vmatprep.subr.mxu0 0.0
  %202 = vmatpush1.msra.mxu0 0.0
  %203 = vmatprep.subr.mxu0 0.0
  %204 = vmatpush1.msra.mxu0 0.0
  %205 = vmatprep.subr.mxu0 0.0
  %206 = vmatpush1.msra.mxu0 0.0
  %207 = vmatprep.subr.mxu0 0.0
  %208 = vmatpush1.msra.mxu0 0.0
  %209 = vmatprep.subr.mxu0 0.0
  %210 = vmatpush1.msra.mxu0 0.0
  %211 = vmatprep.subr.mxu0 0.0
  %212 = vmatpush1.msra.mxu0 0.0
  %213 = vmatprep.subr.mxu0 0.0
  %214 = vmatpush1.msra.mxu0 0.0
  %215 = vmatprep.subr.mxu0 0.0
  %216 = vmatpush1.msra.mxu0 0.0
  %217 = vmatprep.subr.mxu0 0.0
  %218 = vmatpush1.msra.mxu0 0.0
  %219 = vmatprep.subr.mxu0 0.0
  %220 = vmatpush1.msra.mxu0 0.0
  %221 = vmatprep.subr.mxu0 0.0
  %222 = vmatpush1.msra.mxu0 0.0
  %223 = vmatprep.subr.mxu0 0.0
  %224 = vmatpush1.msra.mxu0 0.0
  %225 = vmatprep.subr.mxu0 0.0
  %226 = vmatpush1.msra.mxu0 0.0
  %227 = vmatprep.subr.mxu0 0.0
  %228 = vmatpush1.msra.mxu0 0.0
  %229 = vmatprep.subr.mxu0 0.0
  %230 = vmatpush1.msra.mxu0 0.0
  %231 = vmatprep.subr.mxu0 0.0
  %232 = vmatpush1.msra.mxu0 0.0
  %233 = vmatprep.subr.mxu0 0.0
  %234 = vmatpush1.msra.mxu0 0.0
  %235 = vmatprep.subr.mxu0 0.0
  %236 = vmatpush1.msra.mxu0 0.0
  %237 = vmatprep.mubr.f32.mxu0 0.0
  %238 = vmatmul.mubr.f32.gmra.mrb[0].mxu0 %v168
  %v239 = vpop.f32.mrb[0].mxu0
  %v240 = vadd.f32 0.0, %v239
  %v241 = vpop.f32.mrb[0].mxu0
  %242 = vmatprep.mubr.f32.mxu0 0.0
  %243 = vmatmul.mubr.f32.gmra.mrb[0].mxu0 %v171
  %v244 = vpop.f32.mrb[0].mxu0
  %v245 = vadd.f32 0.0, %v244
  %v246 = vpop.f32.mrb[0].mxu0
  %247 = vdwg.mxu0
  %v248 = vmax.f32 %v240, 0.0
  %v249 = vmax.f32 %v245, 0.0
  %vm250 = vcmask 64512
  %251 = vst.msk [vmem:[%s3] sm:$0xff] %vm250, %v248
  %252 = vst.msk [vmem:[%s3 + $0x8] sm:$0xff] %vm250, %v249
  // Predicated region
  $region14: #{tpu_custom_call.1} parent=0 // pred_check
    _
  $region15: #{tpu_custom_call.1} parent=0 // pred_check_branch
    %254 = sbr.rel (0) target = $region17
  $region16: #{tpu_custom_call.1} parent=0 // pred_region
    _
  $region17: #{tpu_custom_call.1} parent=0 // pred_fallthru
    _
  // Predicated region
  $region18: #{tpu_custom_call.1} parent=0 // pred_check
    _
  $region19: #{tpu_custom_call.1} parent=0 // pred_check_branch
    %256 = sbr.rel (0) target = $region21
  $region20: #{tpu_custom_call.1} parent=0 // pred_region
    _
  $region21: #{tpu_custom_call.1} parent=0 // pred_fallthru
    _

</llo_original>
